<compile_context>
chip_gen: v7x
topology: tpu7x:2x2x1
jax: 0.10.0
libtpu: 0.0.40
codegen_flags: <defaults>
</compile_context>

<pallas_src>
import functools

import jax
import jax.numpy as jnp
from jax import lax
from jax.experimental import pallas as pl
from jax.experimental.pallas import tpu as pltpu

LANES = 128
ROW_ALIGN = 32                 # int8 sublane-tile granularity is (32, 128)
_VMEM_TILE_BUDGET = 8 << 20    # conservative: fits default scoped VMEM on v5e/v6e/v7x


def _align_up(n, m):
    return -(-n // m) * m


def _if_encoder_kernel(x_ref, o_ref, *, step_num, max_rate, threshold,
                       reset_mode, chunk):
    """x_ref: (tm, 128) f32 input tile; o_ref: (step_num, tm, 128) int8 tile."""
    thr = jnp.float32(threshold)
    num_chunks = x_ref.shape[0] // chunk

    def body(c, carry):
        off = pl.multiple_of(c * chunk, chunk)
        x = x_ref[pl.ds(off, chunk), :]
        drive = x if max_rate == 1.0 else x * jnp.float32(max_rate)
        v = jnp.zeros_like(drive)
        # step_num is small & static -> Python-unrolled; v / drive stay in vregs
        # for the whole step loop (no per-step VMEM round trip).
        for t in range(step_num):
            v = v + drive
            pos = v >= thr
            neg = v <= -thr
            spike = (pos.astype(jnp.int32) - neg.astype(jnp.int32)).astype(jnp.int8)
            if reset_mode == "soft":
                v = jnp.where(pos, v - thr, v)
                v = jnp.where(neg, v + thr, v)
            else:  # hard reset
                v = jnp.where(pos | neg, jnp.float32(0.0), v)
            o_ref[t, pl.ds(off, chunk), :] = spike
        return carry

    lax.fori_loop(0, num_chunks, body, 0)


def _choose_tile(rows, step_num):
    """Pick (tile_rows, grid) so the double-buffered tile fits comfortably in
    VMEM on every TPU generation while keeping a few grid iterations for
    megacore sharding."""
    # bytes per tile row: double-buffered f32 input + double-buffered int8 output
    per_row = 2 * LANES * 4 + 2 * step_num * LANES
    tm_budget = max(ROW_ALIGN, min(1024, _VMEM_TILE_BUDGET // per_row))
    g = -(-rows // tm_budget)
    # Prefer >=4 grid steps on large inputs so ("parallel",) can shard across
    # the 2 TensorCores of v7x without shrinking tiles below ~256 rows.
    if g < 4 and rows >= 4 * 256:
        g = 4
    tm = _align_up(-(-rows // g), ROW_ALIGN)
    return tm, g


def signed_if_encoder(x, step_num, max_rate=1.0, threshold=1.0, reset_mode="soft"):
    """x: [B, C, H, W] -> [B, C, H, W, step_num] float32 of {-1, 0, +1}."""
    assert reset_mode in ("soft", "hard")
    orig_shape = x.shape
    total = x.size

    # Flatten to a lane-dense (rows, 128) slab, padded to a multiple of the tile.
    flat = x.reshape(-1).astype(jnp.float32)
    rows = -(-total // LANES)
    tm, grid_n = _choose_tile(rows, step_num)
    rows_padded = tm * grid_n
    padded_total = rows_padded * LANES
    if padded_total != total:
        flat = jnp.pad(flat, (0, padded_total - total))
    x2d = flat.reshape(rows_padded, LANES)

    chunk = 64 if tm % 64 == 0 else ROW_ALIGN

    kernel = functools.partial(
        _if_encoder_kernel,
        step_num=step_num,
        max_rate=float(max_rate),
        threshold=float(threshold),
        reset_mode=reset_mode,
        chunk=chunk,
    )

    out = pl.pallas_call(
        kernel,
        out_shape=jax.ShapeDtypeStruct((step_num, rows_padded, LANES), jnp.int8),
        grid_spec=pltpu.PrefetchScalarGridSpec(
            num_scalar_prefetch=0,
            grid=(grid_n,),
            in_specs=[pl.BlockSpec((tm, LANES), lambda i: (i, 0))],
            out_specs=pl.BlockSpec((step_num, tm, LANES), lambda i: (0, i, 0)),
        ),
        compiler_params=pltpu.CompilerParams(
            dimension_semantics=("parallel",),
        ),
    )(x2d)

    # Back to the PyTorch layout: slice off padding while still int8, then a
    # single fused cast+transpose: [T, total] int8 -> [B, C, H, W, T] float32.
    # TODO(synk): if the downstream consumer can take step-major int8 directly,
    # drop this cast/transpose and feed the kernel output as-is.
    out = out.reshape(step_num, padded_total)[:, :total]
    out = out.astype(jnp.float32).reshape((step_num,) + orig_shape)
    out = jnp.moveaxis(out, 0, -1)
    return out


def _reference(x, step_num, max_rate=1.0, threshold=1.0, reset_mode="soft"):
    """Pure-JAX reference mirroring the PyTorch forward."""
    v = jnp.zeros_like(x)
    spikes = []
    for _ in range(step_num):
        v = v + x * max_rate
        pos = v >= threshold
        neg = v <= -threshold
        spike = jnp.where(pos, 1.0, jnp.where(neg, -1.0, 0.0))
        if reset_mode == "soft":
            v = jnp.where(pos, v - threshold, v)
            v = jnp.where(neg, v + threshold, v)
        else:
            v = jnp.where(pos | neg, 0.0, v)
        spikes.append(spike)
    return jnp.stack(spikes, axis=-1)


if __name__ == "__main__":
    key = jax.random.PRNGKey(0)
    B, C, H, W = 2, 4, 16, 16
    step_num = 8
    # images scaled into [0,1] per the module docstring; use signed values too
    # since the encoder is "signed".
    x = jax.random.uniform(key, (B, C, H, W), dtype=jnp.float32,
                           minval=-1.0, maxval=1.0)

    threshold = 1.0
    max_rate = 1.0

    for mode in ("soft", "hard"):
        out = signed_if_encoder(x, step_num, max_rate=max_rate,
                                threshold=threshold, reset_mode=mode)
        out = jax.block_until_ready(out)
        ref = _reference(x, step_num, max_rate=max_rate,
                         threshold=threshold, reset_mode=mode)
        assert out.shape == (B, C, H, W, step_num), out.shape
        assert out.dtype == jnp.float32
        assert jnp.array_equal(out, ref), f"mismatch vs reference ({mode})"

    print("KERNEL_OK")
</pallas_src>

<mosaic_0001>
module attributes {stable_mosaic.version = 11 : i64} {
  func.func @_if_encoder_kernel(%arg0: i32, %arg1: memref<32x128xf32, #tpu.memory_space<vmem>>, %arg2: memref<8x32x128xi8, #tpu.memory_space<vmem>>) attributes {dimension_semantics = [#tpu.dimension_semantics<parallel>], iteration_bounds = array<i64: 1>, scalar_prefetch = 0 : i64, scratch_operands = 0 : i64, tpu.core_type = #tpu.core_type<tc>, window_params = [{transform_indices = @transform_0, window_bounds = array<i64: 32, 128>}, {transform_indices = @transform_1, window_bounds = array<i64: 8, 32, 128>}]} {
    %cst = arith.constant 1.000000e+00 : f32
    %c0_i32 = arith.constant 0 : i32
    %c32_i32 = arith.constant 32 : i32
    %0 = arith.muli %c0_i32, %c32_i32 : i32
    %1 = tpu.assume_multiple %0, 32 : i32
    %2 = arith.index_cast %1 : i32 to index
    %c0 = arith.constant 0 : index
    %3 = vector.load %arg1[%2, %c0] : memref<32x128xf32, #tpu.memory_space<vmem>>, vector<32x128xf32>
    %cst_0 = arith.constant 0.000000e+00 : f32
    %4 = vector.broadcast %cst_0 : f32 to vector<32x128xf32>
    %5 = arith.addf %4, %3 : vector<32x128xf32>
    %6 = vector.broadcast %cst : f32 to vector<32x128xf32>
    %7 = arith.cmpf oge, %5, %6 : vector<32x128xf32>
    %cst_1 = arith.constant 0.000000e+00 : f32
    %8 = arith.subf %cst_1, %cst : f32
    %9 = vector.broadcast %8 : f32 to vector<32x128xf32>
    %10 = arith.cmpf ole, %5, %9 : vector<32x128xf32>
    %11 = arith.extui %7 : vector<32x128xi1> to vector<32x128xi32>
    %12 = arith.extui %10 : vector<32x128xi1> to vector<32x128xi32>
    %13 = arith.subi %11, %12 : vector<32x128xi32>
    %14 = arith.trunci %13 : vector<32x128xi32> to vector<32x128xi8>
    %15 = vector.broadcast %cst : f32 to vector<32x128xf32>
    %16 = arith.subf %5, %15 : vector<32x128xf32>
    %17 = arith.select %7, %16, %5 : vector<32x128xi1>, vector<32x128xf32>
    %18 = vector.broadcast %cst : f32 to vector<32x128xf32>
    %19 = arith.addf %17, %18 : vector<32x128xf32>
    %20 = arith.select %10, %19, %17 : vector<32x128xi1>, vector<32x128xf32>
    %c0_2 = arith.constant 0 : index
    %21 = arith.index_cast %1 : i32 to index
    %c0_3 = arith.constant 0 : index
    %22 = vector.load %arg2[%c0_2, %21, %c0_3] : memref<8x32x128xi8, #tpu.memory_space<vmem>>, vector<1x32x128xi8>
    %23 = vector.shape_cast %22 : vector<1x32x128xi8> to vector<32x128xi8>
    %24 = vector.shape_cast %14 : vector<32x128xi8> to vector<1x32x128xi8>
    tpu.vector_store %arg2[%c0_2, %21, %c0_3], %24 {strides = array<i32>} : memref<8x32x128xi8, #tpu.memory_space<vmem>>, vector<1x32x128xi8>,
    %25 = arith.addf %20, %3 : vector<32x128xf32>
    %26 = vector.broadcast %cst : f32 to vector<32x128xf32>
    %27 = arith.cmpf oge, %25, %26 : vector<32x128xf32>
    %cst_4 = arith.constant 0.000000e+00 : f32
    %28 = arith.subf %cst_4, %cst : f32
    %29 = vector.broadcast %28 : f32 to vector<32x128xf32>
    %30 = arith.cmpf ole, %25, %29 : vector<32x128xf32>
    %31 = arith.extui %27 : vector<32x128xi1> to vector<32x128xi32>
    %32 = arith.extui %30 : vector<32x128xi1> to vector<32x128xi32>
    %33 = arith.subi %31, %32 : vector<32x128xi32>
    %34 = arith.trunci %33 : vector<32x128xi32> to vector<32x128xi8>
    %35 = vector.broadcast %cst : f32 to vector<32x128xf32>
    %36 = arith.subf %25, %35 : vector<32x128xf32>
    %37 = arith.select %27, %36, %25 : vector<32x128xi1>, vector<32x128xf32>
    %38 = vector.broadcast %cst : f32 to vector<32x128xf32>
    %39 = arith.addf %37, %38 : vector<32x128xf32>
    %40 = arith.select %30, %39, %37 : vector<32x128xi1>, vector<32x128xf32>
    %c1 = arith.constant 1 : index
    %41 = arith.index_cast %1 : i32 to index
    %c0_5 = arith.constant 0 : index
    %42 = vector.load %arg2[%c1, %41, %c0_5] : memref<8x32x128xi8, #tpu.memory_space<vmem>>, vector<1x32x128xi8>
    %43 = vector.shape_cast %42 : vector<1x32x128xi8> to vector<32x128xi8>
    %44 = vector.shape_cast %34 : vector<32x128xi8> to vector<1x32x128xi8>
    tpu.vector_store %arg2[%c1, %41, %c0_5], %44 {strides = array<i32>} : memref<8x32x128xi8, #tpu.memory_space<vmem>>, vector<1x32x128xi8>,
    %45 = arith.addf %40, %3 : vector<32x128xf32>
    %46 = vector.broadcast %cst : f32 to vector<32x128xf32>
    %47 = arith.cmpf oge, %45, %46 : vector<32x128xf32>
    %cst_6 = arith.constant 0.000000e+00 : f32
    %48 = arith.subf %cst_6, %cst : f32
    %49 = vector.broadcast %48 : f32 to vector<32x128xf32>
    %50 = arith.cmpf ole, %45, %49 : vector<32x128xf32>
    %51 = arith.extui %47 : vector<32x128xi1> to vector<32x128xi32>
    %52 = arith.extui %50 : vector<32x128xi1> to vector<32x128xi32>
    %53 = arith.subi %51, %52 : vector<32x128xi32>
    %54 = arith.trunci %53 : vector<32x128xi32> to vector<32x128xi8>
    %55 = vector.broadcast %cst : f32 to vector<32x128xf32>
    %56 = arith.subf %45, %55 : vector<32x128xf32>
    %57 = arith.select %47, %56, %45 : vector<32x128xi1>, vector<32x128xf32>
    %58 = vector.broadcast %cst : f32 to vector<32x128xf32>
    %59 = arith.addf %57, %58 : vector<32x128xf32>
    %60 = arith.select %50, %59, %57 : vector<32x128xi1>, vector<32x128xf32>
    %c2 = arith.constant 2 : index
    %61 = arith.index_cast %1 : i32 to index
    %c0_7 = arith.constant 0 : index
    %62 = vector.load %arg2[%c2, %61, %c0_7] : memref<8x32x128xi8, #tpu.memory_space<vmem>>, vector<1x32x128xi8>
    %63 = vector.shape_cast %62 : vector<1x32x128xi8> to vector<32x128xi8>
    %64 = vector.shape_cast %54 : vector<32x128xi8> to vector<1x32x128xi8>
    tpu.vector_store %arg2[%c2, %61, %c0_7], %64 {strides = array<i32>} : memref<8x32x128xi8, #tpu.memory_space<vmem>>, vector<1x32x128xi8>,
    %65 = arith.addf %60, %3 : vector<32x128xf32>
    %66 = vector.broadcast %cst : f32 to vector<32x128xf32>
    %67 = arith.cmpf oge, %65, %66 : vector<32x128xf32>
    %cst_8 = arith.constant 0.000000e+00 : f32
    %68 = arith.subf %cst_8, %cst : f32
    %69 = vector.broadcast %68 : f32 to vector<32x128xf32>
    %70 = arith.cmpf ole, %65, %69 : vector<32x128xf32>
    %71 = arith.extui %67 : vector<32x128xi1> to vector<32x128xi32>
    %72 = arith.extui %70 : vector<32x128xi1> to vector<32x128xi32>
    %73 = arith.subi %71, %72 : vector<32x128xi32>
    %74 = arith.trunci %73 : vector<32x128xi32> to vector<32x128xi8>
    %75 = vector.broadcast %cst : f32 to vector<32x128xf32>
    %76 = arith.subf %65, %75 : vector<32x128xf32>
    %77 = arith.select %67, %76, %65 : vector<32x128xi1>, vector<32x128xf32>
    %78 = vector.broadcast %cst : f32 to vector<32x128xf32>
    %79 = arith.addf %77, %78 : vector<32x128xf32>
    %80 = arith.select %70, %79, %77 : vector<32x128xi1>, vector<32x128xf32>
    %c3 = arith.constant 3 : index
    %81 = arith.index_cast %1 : i32 to index
    %c0_9 = arith.constant 0 : index
    %82 = vector.load %arg2[%c3, %81, %c0_9] : memref<8x32x128xi8, #tpu.memory_space<vmem>>, vector<1x32x128xi8>
    %83 = vector.shape_cast %82 : vector<1x32x128xi8> to vector<32x128xi8>
    %84 = vector.shape_cast %74 : vector<32x128xi8> to vector<1x32x128xi8>
    tpu.vector_store %arg2[%c3, %81, %c0_9], %84 {strides = array<i32>} : memref<8x32x128xi8, #tpu.memory_space<vmem>>, vector<1x32x128xi8>,
    %85 = arith.addf %80, %3 : vector<32x128xf32>
    %86 = vector.broadcast %cst : f32 to vector<32x128xf32>
    %87 = arith.cmpf oge, %85, %86 : vector<32x128xf32>
    %cst_10 = arith.constant 0.000000e+00 : f32
    %88 = arith.subf %cst_10, %cst : f32
    %89 = vector.broadcast %88 : f32 to vector<32x128xf32>
    %90 = arith.cmpf ole, %85, %89 : vector<32x128xf32>
    %91 = arith.extui %87 : vector<32x128xi1> to vector<32x128xi32>
    %92 = arith.extui %90 : vector<32x128xi1> to vector<32x128xi32>
    %93 = arith.subi %91, %92 : vector<32x128xi32>
    %94 = arith.trunci %93 : vector<32x128xi32> to vector<32x128xi8>
    %95 = vector.broadcast %cst : f32 to vector<32x128xf32>
    %96 = arith.subf %85, %95 : vector<32x128xf32>
    %97 = arith.select %87, %96, %85 : vector<32x128xi1>, vector<32x128xf32>
    %98 = vector.broadcast %cst : f32 to vector<32x128xf32>
    %99 = arith.addf %97, %98 : vector<32x128xf32>
    %100 = arith.select %90, %99, %97 : vector<32x128xi1>, vector<32x128xf32>
    %c4 = arith.constant 4 : index
    %101 = arith.index_cast %1 : i32 to index
    %c0_11 = arith.constant 0 : index
    %102 = vector.load %arg2[%c4, %101, %c0_11] : memref<8x32x128xi8, #tpu.memory_space<vmem>>, vector<1x32x128xi8>
    %103 = vector.shape_cast %102 : vector<1x32x128xi8> to vector<32x128xi8>
    %104 = vector.shape_cast %94 : vector<32x128xi8> to vector<1x32x128xi8>
    tpu.vector_store %arg2[%c4, %101, %c0_11], %104 {strides = array<i32>} : memref<8x32x128xi8, #tpu.memory_space<vmem>>, vector<1x32x128xi8>,
    %105 = arith.addf %100, %3 : vector<32x128xf32>
    %106 = vector.broadcast %cst : f32 to vector<32x128xf32>
    %107 = arith.cmpf oge, %105, %106 : vector<32x128xf32>
    %cst_12 = arith.constant 0.000000e+00 : f32
    %108 = arith.subf %cst_12, %cst : f32
    %109 = vector.broadcast %108 : f32 to vector<32x128xf32>
    %110 = arith.cmpf ole, %105, %109 : vector<32x128xf32>
    %111 = arith.extui %107 : vector<32x128xi1> to vector<32x128xi32>
    %112 = arith.extui %110 : vector<32x128xi1> to vector<32x128xi32>
    %113 = arith.subi %111, %112 : vector<32x128xi32>
    %114 = arith.trunci %113 : vector<32x128xi32> to vector<32x128xi8>
    %115 = vector.broadcast %cst : f32 to vector<32x128xf32>
    %116 = arith.subf %105, %115 : vector<32x128xf32>
    %117 = arith.select %107, %116, %105 : vector<32x128xi1>, vector<32x128xf32>
    %118 = vector.broadcast %cst : f32 to vector<32x128xf32>
    %119 = arith.addf %117, %118 : vector<32x128xf32>
    %120 = arith.select %110, %119, %117 : vector<32x128xi1>, vector<32x128xf32>
    %c5 = arith.constant 5 : index
    %121 = arith.index_cast %1 : i32 to index
    %c0_13 = arith.constant 0 : index
    %122 = vector.load %arg2[%c5, %121, %c0_13] : memref<8x32x128xi8, #tpu.memory_space<vmem>>, vector<1x32x128xi8>
    %123 = vector.shape_cast %122 : vector<1x32x128xi8> to vector<32x128xi8>
    %124 = vector.shape_cast %114 : vector<32x128xi8> to vector<1x32x128xi8>
    tpu.vector_store %arg2[%c5, %121, %c0_13], %124 {strides = array<i32>} : memref<8x32x128xi8, #tpu.memory_space<vmem>>, vector<1x32x128xi8>,
    %125 = arith.addf %120, %3 : vector<32x128xf32>
    %126 = vector.broadcast %cst : f32 to vector<32x128xf32>
    %127 = arith.cmpf oge, %125, %126 : vector<32x128xf32>
    %cst_14 = arith.constant 0.000000e+00 : f32
    %128 = arith.subf %cst_14, %cst : f32
    %129 = vector.broadcast %128 : f32 to vector<32x128xf32>
    %130 = arith.cmpf ole, %125, %129 : vector<32x128xf32>
    %131 = arith.extui %127 : vector<32x128xi1> to vector<32x128xi32>
    %132 = arith.extui %130 : vector<32x128xi1> to vector<32x128xi32>
    %133 = arith.subi %131, %132 : vector<32x128xi32>
    %134 = arith.trunci %133 : vector<32x128xi32> to vector<32x128xi8>
    %135 = vector.broadcast %cst : f32 to vector<32x128xf32>
    %136 = arith.subf %125, %135 : vector<32x128xf32>
    %137 = arith.select %127, %136, %125 : vector<32x128xi1>, vector<32x128xf32>
    %138 = vector.broadcast %cst : f32 to vector<32x128xf32>
    %139 = arith.addf %137, %138 : vector<32x128xf32>
    %140 = arith.select %130, %139, %137 : vector<32x128xi1>, vector<32x128xf32>
    %c6 = arith.constant 6 : index
    %141 = arith.index_cast %1 : i32 to index
    %c0_15 = arith.constant 0 : index
    %142 = vector.load %arg2[%c6, %141, %c0_15] : memref<8x32x128xi8, #tpu.memory_space<vmem>>, vector<1x32x128xi8>
    %143 = vector.shape_cast %142 : vector<1x32x128xi8> to vector<32x128xi8>
    %144 = vector.shape_cast %134 : vector<32x128xi8> to vector<1x32x128xi8>
    tpu.vector_store %arg2[%c6, %141, %c0_15], %144 {strides = array<i32>} : memref<8x32x128xi8, #tpu.memory_space<vmem>>, vector<1x32x128xi8>,
    %145 = arith.addf %140, %3 : vector<32x128xf32>
    %146 = vector.broadcast %cst : f32 to vector<32x128xf32>
    %147 = arith.cmpf oge, %145, %146 : vector<32x128xf32>
    %cst_16 = arith.constant 0.000000e+00 : f32
    %148 = arith.subf %cst_16, %cst : f32
    %149 = vector.broadcast %148 : f32 to vector<32x128xf32>
    %150 = arith.cmpf ole, %145, %149 : vector<32x128xf32>
    %151 = arith.extui %147 : vector<32x128xi1> to vector<32x128xi32>
    %152 = arith.extui %150 : vector<32x128xi1> to vector<32x128xi32>
    %153 = arith.subi %151, %152 : vector<32x128xi32>
    %154 = arith.trunci %153 : vector<32x128xi32> to vector<32x128xi8>
    %c7 = arith.constant 7 : index
    %155 = arith.index_cast %1 : i32 to index
    %c0_17 = arith.constant 0 : index
    %156 = vector.load %arg2[%c7, %155, %c0_17] : memref<8x32x128xi8, #tpu.memory_space<vmem>>, vector<1x32x128xi8>
    %157 = vector.shape_cast %156 : vector<1x32x128xi8> to vector<32x128xi8>
    %158 = vector.shape_cast %154 : vector<32x128xi8> to vector<1x32x128xi8>
    tpu.vector_store %arg2[%c7, %155, %c0_17], %158 {strides = array<i32>} : memref<8x32x128xi8, #tpu.memory_space<vmem>>, vector<1x32x128xi8>,
    %c1_i32 = arith.constant 1 : i32
    return
  }
  func.func @transform_0(%arg0: i32) -> (i32, i32) {
    %c0_i32 = arith.constant 0 : i32
    %c0_i32_0 = arith.constant 0 : i32
    return %arg0, %c0_i32 : i32, i32
  }
  func.func @transform_1(%arg0: i32) -> (i32, i32, i32) {
    %c0_i32 = arith.constant 0 : i32
    %c0_i32_0 = arith.constant 0 : i32
    %c0_i32_1 = arith.constant 0 : i32
    return %c0_i32, %arg0, %c0_i32_0 : i32, i32, i32
  }
}

</mosaic_0001>

<llo_original>
// kernel: tpu_custom_call.1
$region0: #{tpu_custom_call.1}
  #allocation0 [shape = 'u32[]', space=smem, size = 0x4, offset = 0x4, fixed_abs, tag = 'smem constant byte address 0x4 - core index']
  #allocation1 [shape = 'u32[144,128]{1,0:T(1,128)}', space=vmem, size = 0x12000, scoped, tag = 'internal scratch']
  %s0 = inlined_call_operand.hbm [shape: f32[32,128], index: 0, kind: input, shape index: {}]
  %s1 = inlined_call_operand.hbm [shape: s8[8,32,128], index: 1, kind: output, shape index: {}]
  %s2 = sld [smem:[#allocation0]]
  $region18: #{tpu_custom_call.1} parent=0
    _
  %s4 = ssub.s32 1, %s2
  %s5 = scalar_select 0, %s4, %s2
  $region1: #{tpu_custom_call.1} parent=0
    #allocation2 [shape = 'u8[16384]{0}', space=vmem, size = 0x4000, scoped, tag = 'input window, operand 0, single buffered']
    #allocation3 [shape = 's32[1]{0}', space=sflag, size = 0x4, scoped, tag = 'scoped memory for tpu_custom_call.1']
    #allocation4 [shape = 's32[1]{0}', space=sflag, size = 0x4, scoped, tag = 'scoped memory for tpu_custom_call.1']
    #allocation5 [shape = 'u8[32768]{0}', space=vmem, size = 0x8000, scoped, tag = 'output window, operand 0, single buffered']
    %6 = vsyncpa [#allocation3], 0
    %7 = vsyncpa [#allocation4], 0
    // Predicated region
    $region2: #{tpu_custom_call.1} parent=1 // pred_check
      _
    $region3: #{tpu_custom_call.1} parent=1 // pred_check_branch
      %9 = sbr.rel (0) target = $region5
    $region4: #{tpu_custom_call.1} parent=1 // pred_region
      %s11 = ssub.s32 512, 512
      %12 = vsyncadd [#allocation3], %s11
      %s13 = sshll.u32 [#allocation2], 4
      %s14 = int_to_ptr.vmem [resolvable:$true] %s13
      %19 = dma.hbm_to_vmem [thread:$0]  %s0, 512, %s14, [#allocation3], 128, 128, 8
    $region5: #{tpu_custom_call.1} parent=1 // pred_fallthru
      _
    // Predicated region
    $region6: #{tpu_custom_call.1} parent=1 // pred_check
      _
    $region7: #{tpu_custom_call.1} parent=1 // pred_check_branch
      %21 = sbr.rel (0) target = $region9
    $region8: #{tpu_custom_call.1} parent=1 // pred_region
      %22 = dma.done [#allocation3], 512
    $region9: #{tpu_custom_call.1} parent=1 // pred_fallthru
      _
    %v23 = vld [vmem:[#allocation2] sm:$0xff]
    %v24 = vld [vmem:[#allocation2 + $0x8] sm:$0xff]
    %v25 = vld [vmem:[#allocation2 + $0x10] sm:$0xff]
    %v26 = vld [vmem:[#allocation2 + $0x18] sm:$0xff]
    %v27 = vadd.f32 %v23, 0.0
    %v28 = vadd.f32 %v24, 0.0
    %v29 = vadd.f32 %v25, 0.0
    %v30 = vadd.f32 %v26, 0.0
    %vm31 = vcmp.ge.f32.partialorder %v27, 1.0
    %vm32 = vcmp.ge.f32.partialorder %v28, 1.0
    %vm33 = vcmp.ge.f32.partialorder %v29, 1.0
    %vm34 = vcmp.ge.f32.partialorder %v30, 1.0
    %vm35 = vcmp.le.f32.partialorder %v27, -1.0
    %vm36 = vcmp.le.f32.partialorder %v28, -1.0
    %vm37 = vcmp.le.f32.partialorder %v29, -1.0
    %vm38 = vcmp.le.f32.partialorder %v30, -1.0
    %v39 = vsel %vm31, 1, 0
    %v40 = vsel %vm32, 1, 0
    %v41 = vsel %vm33, 1, 0
    %v42 = vsel %vm34, 1, 0
    %v43 = vsel %vm35, 1, 0
    %v44 = vsel %vm36, 1, 0
    %v45 = vsel %vm37, 1, 0
    %v46 = vsel %vm38, 1, 0
    %v47 = vsub.s32 %v39, %v43
    %v48 = vsub.s32 %v40, %v44
    %v49 = vsub.s32 %v41, %v45
    %v50 = vsub.s32 %v42, %v46
    %v51 = vpack.c.b16 %v48, %v47
    %v52 = vpack.c.b16 %v50, %v49
    %v53 = vpack.c.b8 %v52, %v51
    %v54 = vsub.f32 %v27, 1.0
    %v55 = vsub.f32 %v28, 1.0
    %v56 = vsub.f32 %v29, 1.0
    %v57 = vsub.f32 %v30, 1.0
    %v58 = vsel %vm31, %v54, %v27
    %v59 = vsel %vm32, %v55, %v28
    %v60 = vsel %vm33, %v56, %v29
    %v61 = vsel %vm34, %v57, %v30
    %v62 = vadd.f32 %v58, 1.0
    %v63 = vadd.f32 %v59, 1.0
    %v64 = vadd.f32 %v60, 1.0
    %v65 = vadd.f32 %v61, 1.0
    %v66 = vsel %vm35, %v62, %v58
    %v67 = vsel %vm36, %v63, %v59
    %v68 = vsel %vm37, %v64, %v60
    %v69 = vsel %vm38, %v65, %v61
    %70 = vst [vmem:[#allocation5] sm:$0xff] %v53
    %v71 = vadd.f32 %v66, %v23
    %v72 = vadd.f32 %v67, %v24
    %v73 = vadd.f32 %v68, %v25
    %v74 = vadd.f32 %v69, %v26
    %vm75 = vcmp.ge.f32.partialorder %v71, 1.0
    %vm76 = vcmp.ge.f32.partialorder %v72, 1.0
    %vm77 = vcmp.ge.f32.partialorder %v73, 1.0
    %vm78 = vcmp.ge.f32.partialorder %v74, 1.0
    %vm79 = vcmp.le.f32.partialorder %v71, -1.0
    %vm80 = vcmp.le.f32.partialorder %v72, -1.0
    %vm81 = vcmp.le.f32.partialorder %v73, -1.0
    %vm82 = vcmp.le.f32.partialorder %v74, -1.0
    %v83 = vsel %vm75, 1, 0
    %v84 = vsel %vm76, 1, 0
    %v85 = vsel %vm77, 1, 0
    %v86 = vsel %vm78, 1, 0
    %v87 = vsel %vm79, 1, 0
    %v88 = vsel %vm80, 1, 0
    %v89 = vsel %vm81, 1, 0
    %v90 = vsel %vm82, 1, 0
    %v91 = vsub.s32 %v83, %v87
    %v92 = vsub.s32 %v84, %v88
    %v93 = vsub.s32 %v85, %v89
    %v94 = vsub.s32 %v86, %v90
    %v95 = vpack.c.b16 %v92, %v91
    %v96 = vpack.c.b16 %v94, %v93
    %v97 = vpack.c.b8 %v96, %v95
    %v98 = vsub.f32 %v71, 1.0
    %v99 = vsub.f32 %v72, 1.0
    %v100 = vsub.f32 %v73, 1.0
    %v101 = vsub.f32 %v74, 1.0
    %v102 = vsel %vm75, %v98, %v71
    %v103 = vsel %vm76, %v99, %v72
    %v104 = vsel %vm77, %v100, %v73
    %v105 = vsel %vm78, %v101, %v74
    %v106 = vadd.f32 %v102, 1.0
    %v107 = vadd.f32 %v103, 1.0
    %v108 = vadd.f32 %v104, 1.0
    %v109 = vadd.f32 %v105, 1.0
    %v110 = vsel %vm79, %v106, %v102
    %v111 = vsel %vm80, %v107, %v103
    %v112 = vsel %vm81, %v108, %v104
    %v113 = vsel %vm82, %v109, %v105
    %s114 = sadd.s32 0, 1
    %s115 = smul.addr %s114, 8
    %s116 = scalar_lea.vmem [#allocation5], %s115
    %117 = vst [vmem:[%s116] sm:$0xff] %v97
    %v118 = vadd.f32 %v110, %v23
    %v119 = vadd.f32 %v111, %v24
    %v120 = vadd.f32 %v112, %v25
    %v121 = vadd.f32 %v113, %v26
    %vm122 = vcmp.ge.f32.partialorder %v118, 1.0
    %vm123 = vcmp.ge.f32.partialorder %v119, 1.0
    %vm124 = vcmp.ge.f32.partialorder %v120, 1.0
    %vm125 = vcmp.ge.f32.partialorder %v121, 1.0
    %vm126 = vcmp.le.f32.partialorder %v118, -1.0
    %vm127 = vcmp.le.f32.partialorder %v119, -1.0
    %vm128 = vcmp.le.f32.partialorder %v120, -1.0
    %vm129 = vcmp.le.f32.partialorder %v121, -1.0
    %v130 = vsel %vm122, 1, 0
    %v131 = vsel %vm123, 1, 0
    %v132 = vsel %vm124, 1, 0
    %v133 = vsel %vm125, 1, 0
    %v134 = vsel %vm126, 1, 0
    %v135 = vsel %vm127, 1, 0
    %v136 = vsel %vm128, 1, 0
    %v137 = vsel %vm129, 1, 0
    %v138 = vsub.s32 %v130, %v134
    %v139 = vsub.s32 %v131, %v135
    %v140 = vsub.s32 %v132, %v136
    %v141 = vsub.s32 %v133, %v137
    %v142 = vpack.c.b16 %v139, %v138
    %v143 = vpack.c.b16 %v141, %v140
    %v144 = vpack.c.b8 %v143, %v142
    %v145 = vsub.f32 %v118, 1.0
    %v146 = vsub.f32 %v119, 1.0
    %v147 = vsub.f32 %v120, 1.0
    %v148 = vsub.f32 %v121, 1.0
    %v149 = vsel %vm122, %v145, %v118
    %v150 = vsel %vm123, %v146, %v119
    %v151 = vsel %vm124, %v147, %v120
    %v152 = vsel %vm125, %v148, %v121
    %v153 = vadd.f32 %v149, 1.0
    %v154 = vadd.f32 %v150, 1.0
    %v155 = vadd.f32 %v151, 1.0
    %v156 = vadd.f32 %v152, 1.0
    %v157 = vsel %vm126, %v153, %v149
    %v158 = vsel %vm127, %v154, %v150
    %v159 = vsel %vm128, %v155, %v151
    %v160 = vsel %vm129, %v156, %v152
    %s161 = sadd.s32 0, 2
    %s162 = smul.addr %s161, 8
    %s163 = scalar_lea.vmem [#allocation5], %s162
    %164 = vst [vmem:[%s163] sm:$0xff] %v144
    %v165 = vadd.f32 %v157, %v23
    %v166 = vadd.f32 %v158, %v24
    %v167 = vadd.f32 %v159, %v25
    %v168 = vadd.f32 %v160, %v26
    %vm169 = vcmp.ge.f32.partialorder %v165, 1.0
    %vm170 = vcmp.ge.f32.partialorder %v166, 1.0
    %vm171 = vcmp.ge.f32.partialorder %v167, 1.0
    %vm172 = vcmp.ge.f32.partialorder %v168, 1.0
    %vm173 = vcmp.le.f32.partialorder %v165, -1.0
    %vm174 = vcmp.le.f32.partialorder %v166, -1.0
    %vm175 = vcmp.le.f32.partialorder %v167, -1.0
    %vm176 = vcmp.le.f32.partialorder %v168, -1.0
    %v177 = vsel %vm169, 1, 0
    %v178 = vsel %vm170, 1, 0
    %v179 = vsel %vm171, 1, 0
    %v180 = vsel %vm172, 1, 0
    %v181 = vsel %vm173, 1, 0
    %v182 = vsel %vm174, 1, 0
    %v183 = vsel %vm175, 1, 0
    %v184 = vsel %vm176, 1, 0
    %v185 = vsub.s32 %v177, %v181
    %v186 = vsub.s32 %v178, %v182
    %v187 = vsub.s32 %v179, %v183
    %v188 = vsub.s32 %v180, %v184
    %v189 = vpack.c.b16 %v186, %v185
    %v190 = vpack.c.b16 %v188, %v187
    %v191 = vpack.c.b8 %v190, %v189
    %v192 = vsub.f32 %v165, 1.0
    %v193 = vsub.f32 %v166, 1.0
    %v194 = vsub.f32 %v167, 1.0
    %v195 = vsub.f32 %v168, 1.0
    %v196 = vsel %vm169, %v192, %v165
    %v197 = vsel %vm170, %v193, %v166
    %v198 = vsel %vm171, %v194, %v167
    %v199 = vsel %vm172, %v195, %v168
    %v200 = vadd.f32 %v196, 1.0
    %v201 = vadd.f32 %v197, 1.0
    %v202 = vadd.f32 %v198, 1.0
    %v203 = vadd.f32 %v199, 1.0
    %v204 = vsel %vm173, %v200, %v196
    %v205 = vsel %vm174, %v201, %v197
    %v206 = vsel %vm175, %v202, %v198
    %v207 = vsel %vm176, %v203, %v199
    %s208 = sadd.s32 0, 3
    %s209 = smul.addr %s208, 8
    %s210 = scalar_lea.vmem [#allocation5], %s209
    %211 = vst [vmem:[%s210] sm:$0xff] %v191
    %v212 = vadd.f32 %v204, %v23
    %v213 = vadd.f32 %v205, %v24
    %v214 = vadd.f32 %v206, %v25
    %v215 = vadd.f32 %v207, %v26
    %vm216 = vcmp.ge.f32.partialorder %v212, 1.0
    %vm217 = vcmp.ge.f32.partialorder %v213, 1.0
    %vm218 = vcmp.ge.f32.partialorder %v214, 1.0
    %vm219 = vcmp.ge.f32.partialorder %v215, 1.0
    %vm220 = vcmp.le.f32.partialorder %v212, -1.0
    %vm221 = vcmp.le.f32.partialorder %v213, -1.0
    %vm222 = vcmp.le.f32.partialorder %v214, -1.0
    %vm223 = vcmp.le.f32.partialorder %v215, -1.0
    %v224 = vsel %vm216, 1, 0
    %v225 = vsel %vm217, 1, 0
    %v226 = vsel %vm218, 1, 0
    %v227 = vsel %vm219, 1, 0
    %v228 = vsel %vm220, 1, 0
    %v229 = vsel %vm221, 1, 0
    %v230 = vsel %vm222, 1, 0
    %v231 = vsel %vm223, 1, 0
    %v232 = vsub.s32 %v224, %v228
    %v233 = vsub.s32 %v225, %v229
    %v234 = vsub.s32 %v226, %v230
    %v235 = vsub.s32 %v227, %v231
    %v236 = vpack.c.b16 %v233, %v232
    %v237 = vpack.c.b16 %v235, %v234
    %v238 = vpack.c.b8 %v237, %v236
    %v239 = vsub.f32 %v212, 1.0
    %v240 = vsub.f32 %v213, 1.0
    %v241 = vsub.f32 %v214, 1.0
    %v242 = vsub.f32 %v215, 1.0
    %v243 = vsel %vm216, %v239, %v212
    %v244 = vsel %vm217, %v240, %v213
    %v245 = vsel %vm218, %v241, %v214
    %v246 = vsel %vm219, %v242, %v215
    %v247 = vadd.f32 %v243, 1.0
    %v248 = vadd.f32 %v244, 1.0
    %v249 = vadd.f32 %v245, 1.0
    %v250 = vadd.f32 %v246, 1.0
    %v251 = vsel %vm220, %v247, %v243
    %v252 = vsel %vm221, %v248, %v244
    %v253 = vsel %vm222, %v249, %v245
    %v254 = vsel %vm223, %v250, %v246
    %s255 = sadd.s32 0, 4
    %s256 = smul.addr %s255, 8
    %s257 = scalar_lea.vmem [#allocation5], %s256
    %258 = vst [vmem:[%s257] sm:$0xff] %v238
    %v259 = vadd.f32 %v251, %v23
    %v260 = vadd.f32 %v252, %v24
    %v261 = vadd.f32 %v253, %v25
    %v262 = vadd.f32 %v254, %v26
    %vm263 = vcmp.ge.f32.partialorder %v259, 1.0
    %vm264 = vcmp.ge.f32.partialorder %v260, 1.0
    %vm265 = vcmp.ge.f32.partialorder %v261, 1.0
    %vm266 = vcmp.ge.f32.partialorder %v262, 1.0
    %vm267 = vcmp.le.f32.partialorder %v259, -1.0
    %vm268 = vcmp.le.f32.partialorder %v260, -1.0
    %vm269 = vcmp.le.f32.partialorder %v261, -1.0
    %vm270 = vcmp.le.f32.partialorder %v262, -1.0
    %v271 = vsel %vm263, 1, 0
    %v272 = vsel %vm264, 1, 0
    %v273 = vsel %vm265, 1, 0
    %v274 = vsel %vm266, 1, 0
    %v275 = vsel %vm267, 1, 0
    %v276 = vsel %vm268, 1, 0
    %v277 = vsel %vm269, 1, 0
    %v278 = vsel %vm270, 1, 0
    %v279 = vsub.s32 %v271, %v275
    %v280 = vsub.s32 %v272, %v276
    %v281 = vsub.s32 %v273, %v277
    %v282 = vsub.s32 %v274, %v278
    %v283 = vpack.c.b16 %v280, %v279
    %v284 = vpack.c.b16 %v282, %v281
    %v285 = vpack.c.b8 %v284, %v283
    %v286 = vsub.f32 %v259, 1.0
    %v287 = vsub.f32 %v260, 1.0
    %v288 = vsub.f32 %v261, 1.0
    %v289 = vsub.f32 %v262, 1.0
    %v290 = vsel %vm263, %v286, %v259
    %v291 = vsel %vm264, %v287, %v260
    %v292 = vsel %vm265, %v288, %v261
    %v293 = vsel %vm266, %v289, %v262
    %v294 = vadd.f32 %v290, 1.0
    %v295 = vadd.f32 %v291, 1.0
    %v296 = vadd.f32 %v292, 1.0
    %v297 = vadd.f32 %v293, 1.0
    %v298 = vsel %vm267, %v294, %v290
    %v299 = vsel %vm268, %v295, %v291
    %v300 = vsel %vm269, %v296, %v292
    %v301 = vsel %vm270, %v297, %v293
    %s302 = sadd.s32 0, 5
    %s303 = smul.addr %s302, 8
    %s304 = scalar_lea.vmem [#allocation5], %s303
    %305 = vst [vmem:[%s304] sm:$0xff] %v285
    %v306 = vadd.f32 %v298, %v23
    %v307 = vadd.f32 %v299, %v24
    %v308 = vadd.f32 %v300, %v25
    %v309 = vadd.f32 %v301, %v26
    %vm310 = vcmp.ge.f32.partialorder %v306, 1.0
    %vm311 = vcmp.ge.f32.partialorder %v307, 1.0
    %vm312 = vcmp.ge.f32.partialorder %v308, 1.0
    %vm313 = vcmp.ge.f32.partialorder %v309, 1.0
    %vm314 = vcmp.le.f32.partialorder %v306, -1.0
    %vm315 = vcmp.le.f32.partialorder %v307, -1.0
    %vm316 = vcmp.le.f32.partialorder %v308, -1.0
    %vm317 = vcmp.le.f32.partialorder %v309, -1.0
    %v318 = vsel %vm310, 1, 0
    %v319 = vsel %vm311, 1, 0
    %v320 = vsel %vm312, 1, 0
    %v321 = vsel %vm313, 1, 0
    %v322 = vsel %vm314, 1, 0
    %v323 = vsel %vm315, 1, 0
    %v324 = vsel %vm316, 1, 0
    %v325 = vsel %vm317, 1, 0
    %v326 = vsub.s32 %v318, %v322
    %v327 = vsub.s32 %v319, %v323
    %v328 = vsub.s32 %v320, %v324
    %v329 = vsub.s32 %v321, %v325
    %v330 = vpack.c.b16 %v327, %v326
    %v331 = vpack.c.b16 %v329, %v328
    %v332 = vpack.c.b8 %v331, %v330
    %v333 = vsub.f32 %v306, 1.0
    %v334 = vsub.f32 %v307, 1.0
    %v335 = vsub.f32 %v308, 1.0
    %v336 = vsub.f32 %v309, 1.0
    %v337 = vsel %vm310, %v333, %v306
    %v338 = vsel %vm311, %v334, %v307
    %v339 = vsel %vm312, %v335, %v308
    %v340 = vsel %vm313, %v336, %v309
    %v341 = vadd.f32 %v337, 1.0
    %v342 = vadd.f32 %v338, 1.0
    %v343 = vadd.f32 %v339, 1.0
    %v344 = vadd.f32 %v340, 1.0
    %v345 = vsel %vm314, %v341, %v337
    %v346 = vsel %vm315, %v342, %v338
    %v347 = vsel %vm316, %v343, %v339
    %v348 = vsel %vm317, %v344, %v340
    %s349 = sadd.s32 0, 6
    %s350 = smul.addr %s349, 8
    %s351 = scalar_lea.vmem [#allocation5], %s350
    %352 = vst [vmem:[%s351] sm:$0xff] %v332
    %v353 = vadd.f32 %v345, %v23
    %v354 = vadd.f32 %v346, %v24
    %v355 = vadd.f32 %v347, %v25
    %v356 = vadd.f32 %v348, %v26
    %vm357 = vcmp.ge.f32.partialorder %v353, 1.0
    %vm358 = vcmp.ge.f32.partialorder %v354, 1.0
    %vm359 = vcmp.ge.f32.partialorder %v355, 1.0
    %vm360 = vcmp.ge.f32.partialorder %v356, 1.0
    %vm361 = vcmp.le.f32.partialorder %v353, -1.0
    %vm362 = vcmp.le.f32.partialorder %v354, -1.0
    %vm363 = vcmp.le.f32.partialorder %v355, -1.0
    %vm364 = vcmp.le.f32.partialorder %v356, -1.0
    %v365 = vsel %vm357, 1, 0
    %v366 = vsel %vm358, 1, 0
    %v367 = vsel %vm359, 1, 0
    %v368 = vsel %vm360, 1, 0
    %v369 = vsel %vm361, 1, 0
    %v370 = vsel %vm362, 1, 0
    %v371 = vsel %vm363, 1, 0
    %v372 = vsel %vm364, 1, 0
    %v373 = vsub.s32 %v365, %v369
    %v374 = vsub.s32 %v366, %v370
    %v375 = vsub.s32 %v367, %v371
    %v376 = vsub.s32 %v368, %v372
    %v377 = vpack.c.b16 %v374, %v373
    %v378 = vpack.c.b16 %v376, %v375
    %v379 = vpack.c.b8 %v378, %v377
    %s380 = sadd.s32 0, 7
    %s381 = smul.addr %s380, 8
    %s382 = scalar_lea.vmem [#allocation5], %s381
    %383 = vst [vmem:[%s382] sm:$0xff] %v379
    // Predicated region
    $region10: #{tpu_custom_call.1} parent=1 // pred_check
      _
    $region11: #{tpu_custom_call.1} parent=1 // pred_check_branch
      %385 = sbr.rel (0) target = $region13
    $region12: #{tpu_custom_call.1} parent=1 // pred_region
      %s387 = ssub.s32 1024, 1024
      %388 = vsyncadd [#allocation4], %s387
      %s389 = sshll.u32 [#allocation5], 4
      %s390 = int_to_ptr.vmem [resolvable:$true] %s389
      %395 = dma.vmem_to_hbm [thread:$0]  %s390, 1024, %s1, [#allocation4], 128, 128, 8
    $region13: #{tpu_custom_call.1} parent=1 // pred_fallthru
      _
    // Predicated region
    $region14: #{tpu_custom_call.1} parent=1 // pred_check
      _
    $region15: #{tpu_custom_call.1} parent=1 // pred_check_branch
      %397 = sbr.rel (0) target = $region17
    $region16: #{tpu_custom_call.1} parent=1 // pred_region
      %398 = dma.done [#allocation4], 1024
    $region17: #{tpu_custom_call.1} parent=1 // pred_fallthru
      _
    %399 = vsyncpa [#allocation3], 1
    %400 = vsyncpa [#allocation4], 1

</llo_original>
